<compile_context>
chip_gen: v7x
topology: tpu7x:2x2x1
jax: 0.10.0
libtpu: 0.0.40
codegen_flags: <defaults>
</compile_context>

<pallas_src>
import jax
import jax.numpy as jnp
from jax.experimental import pallas as pl
from jax.experimental.pallas import tpu as pltpu

K = 3            # conv kernel size (stride=1, padding=1)
CIN = 4          # input channels
COUT = 8         # encoder conv channels
EMB = 32         # embedding dim (encoder output)
HID = 64         # projection head hidden dim
PROJ = 16        # projection dim
KKC1 = K * K * CIN + 1   # im2col width (+1 ones column folds the conv bias)


def _contrastive_kernel(col_ref, pool_ref, wcb_ref, w1_ref, b1_ref,
                        w2_ref, b2_ref, w3_ref, b3_ref,
                        emb_ref, proj_ref):
    # --- encoder conv (+bias) fused into ONE MXU matmul, contraction K=37 ---
    conv = jnp.maximum(
        jnp.dot(col_ref[...], wcb_ref[...],
                preferred_element_type=jnp.float32), 0.0)        # [tile_n*HW, COUT]

    # --- global average pool as an MXU contraction (block-diag 1/HW) --------
    pooled = jnp.dot(pool_ref[...], conv,
                     preferred_element_type=jnp.float32)         # [tile_n, COUT]

    # --- encoder final linear -> embeddings ---------------------------------
    emb = jnp.dot(pooled, w1_ref[...],
                  preferred_element_type=jnp.float32) + b1_ref[...]

    # --- projection head: Linear -> ReLU -> Linear --------------------------
    h = jnp.maximum(
        jnp.dot(emb, w2_ref[...], preferred_element_type=jnp.float32)
        + b2_ref[...], 0.0)
    proj = jnp.dot(h, w3_ref[...],
                   preferred_element_type=jnp.float32) + b3_ref[...]

    emb_ref[...] = emb
    proj_ref[...] = proj


def init_params(key):
    """Deterministic synthetic parameters (shapes dictated by the module)."""
    ks = jax.random.split(key, 8)
    s = 0.1
    wc = s * jax.random.normal(ks[0], (K * K, CIN, COUT), jnp.float32)
    bc = s * jax.random.normal(ks[1], (1, COUT), jnp.float32)
    w1 = s * jax.random.normal(ks[2], (COUT, EMB), jnp.float32)
    b1 = s * jax.random.normal(ks[3], (1, EMB), jnp.float32)
    w2 = s * jax.random.normal(ks[4], (EMB, HID), jnp.float32)
    b2 = s * jax.random.normal(ks[5], (1, HID), jnp.float32)
    w3 = s * jax.random.normal(ks[6], (HID, PROJ), jnp.float32)
    b3 = s * jax.random.normal(ks[7], (1, PROJ), jnp.float32)
    return (wc, bc, w1, b1, w2, b2, w3, b3)


def _pick_tile_n(n):
    """>=2 grid steps when N>=2 (both v7x TCs busy); cap the tile so the
    quadratic pool matrix and lane-padded input tile stay small."""
    if n <= 1:
        return 1
    cap = 16
    limit = max(1, min(cap, n // 2))
    for t in range(limit, 0, -1):
        if n % t == 0:
            return t
    return 1


def contrastive_forward(x_nchw, params):
    """Returns (embeddings [N, EMB], projections [N, PROJ])."""
    N, C, H, W = x_nchw.shape
    assert C == CIN
    hw = H * W
    assert hw % 8 == 0
    wc, bc, w1, b1, w2, b2, w3, b3 = params

    # --- wrapper-side prep (cheap XLA glue, review-sanctioned im2col) -------
    x = jnp.transpose(x_nchw, (0, 2, 3, 1))                      # NHWC
    xpad = jnp.pad(x, ((0, 0), (1, 1), (1, 1), (0, 0)))
    cols = [xpad[:, dh:dh + H, dw:dw + W, :]
            for dh in range(K) for dw in range(K)]
    patches = jnp.stack(cols, axis=3)                            # [N,H,W,9,CIN]
    col = patches.reshape(N, hw, K * K * CIN)
    col = jnp.concatenate([col, jnp.ones((N, hw, 1), col.dtype)], axis=-1)
    col = col.reshape(N * hw, KKC1)                              # [N*HW, 37]

    # conv weights flattened + bias folded as the last contraction row.
    wcb = jnp.concatenate([wc.reshape(K * K * CIN, COUT), bc], axis=0)  # [37,8]

    tile_n = _pick_tile_n(N)
    grid_n = N // tile_n

    # Block-diagonal pooling matrix: pooled = pool @ relu(conv).
    seg = jnp.arange(tile_n * hw, dtype=jnp.int32) // hw
    pool = (seg[None, :] == jnp.arange(tile_n, dtype=jnp.int32)[:, None]
            ).astype(jnp.float32) / float(hw)                   # [tile_n, tile_n*HW]

    flops = (2 * N * hw * KKC1 * COUT
             + 2 * N * hw * COUT
             + 2 * N * (COUT * EMB + EMB * HID + HID * PROJ))
    bytes_accessed = (col.size * 4 + pool.size * 4
                      + sum(int(p.size) * 4 for p in params)
                      + N * (EMB + PROJ) * 4)

    const2 = lambda i: (0, 0)   # weights / pool stay VMEM-resident
    emb3, proj3 = pl.pallas_call(
        _contrastive_kernel,
        out_shape=(jax.ShapeDtypeStruct((grid_n, tile_n, EMB), jnp.float32),
                   jax.ShapeDtypeStruct((grid_n, tile_n, PROJ), jnp.float32)),
        grid=(grid_n,),
        in_specs=[
            pl.BlockSpec((tile_n * hw, KKC1), lambda i: (i, 0)),   # im2col tile
            pl.BlockSpec((tile_n, tile_n * hw), const2),           # pool matrix
            pl.BlockSpec((KKC1, COUT), const2),
            pl.BlockSpec((COUT, EMB), const2),
            pl.BlockSpec((1, EMB), const2),
            pl.BlockSpec((EMB, HID), const2),
            pl.BlockSpec((1, HID), const2),
            pl.BlockSpec((HID, PROJ), const2),
            pl.BlockSpec((1, PROJ), const2),
        ],
        out_specs=(pl.BlockSpec((None, tile_n, EMB), lambda i: (i, 0, 0)),
                   pl.BlockSpec((None, tile_n, PROJ), lambda i: (i, 0, 0))),
        compiler_params=pltpu.CompilerParams(
            dimension_semantics=("parallel",),
            vmem_limit_bytes=32 * 1024 * 1024),
        cost_estimate=pl.CostEstimate(flops=flops, transcendentals=0,
                                      bytes_accessed=bytes_accessed),
    )(col, pool, wcb, w1, b1, w2, b2, w3, b3)

    return emb3.reshape(N, EMB), proj3.reshape(N, PROJ)


def reference_forward(x_nchw, params):
    """Pure-JAX reference (mirrors the PyTorch semantics)."""
    wc, bc, w1, b1, w2, b2, w3, b3 = params
    wc4 = wc.reshape(K, K, CIN, COUT)
    x = jnp.transpose(x_nchw, (0, 2, 3, 1))
    y = jax.lax.conv_general_dilated(
        x, wc4, window_strides=(1, 1), padding="SAME",
        dimension_numbers=("NHWC", "HWIO", "NHWC"))
    y = jax.nn.relu(y + bc.reshape(1, 1, 1, COUT))
    pooled = y.mean(axis=(1, 2))
    emb = pooled @ w1 + b1[0]
    h = jax.nn.relu(emb @ w2 + b2[0])
    proj = h @ w3 + b3[0]
    return emb, proj


if __name__ == "__main__":
    key = jax.random.PRNGKey(0)
    kx, kp = jax.random.split(key)
    x = jax.random.normal(kx, (2, CIN, 16, 16), jnp.float32)  # NCHW, like PyTorch
    params = init_params(kp)

    emb, proj = jax.jit(contrastive_forward)(x, params)
    jax.block_until_ready((emb, proj))

    emb_ref, proj_ref = reference_forward(x, params)
    assert emb.shape == (2, EMB) and proj.shape == (2, PROJ)
    assert jnp.allclose(emb, emb_ref, atol=1e-4, rtol=1e-4)
    assert jnp.allclose(proj, proj_ref, atol=1e-4, rtol=1e-4)
    print("KERNEL_OK")
</pallas_src>

<mosaic_0001>
module attributes {stable_mosaic.version = 11 : i64} {
  func.func @_contrastive_kernel(%arg0: i32, %arg1: memref<256x37xf32, #tpu.memory_space<vmem>>, %arg2: memref<1x256xf32, #tpu.memory_space<vmem>>, %arg3: memref<37x8xf32, #tpu.memory_space<vmem>>, %arg4: memref<8x32xf32, #tpu.memory_space<vmem>>, %arg5: memref<1x32xf32, #tpu.memory_space<vmem>>, %arg6: memref<32x64xf32, #tpu.memory_space<vmem>>, %arg7: memref<1x64xf32, #tpu.memory_space<vmem>>, %arg8: memref<64x16xf32, #tpu.memory_space<vmem>>, %arg9: memref<1x16xf32, #tpu.memory_space<vmem>>, %arg10: memref<1x1x32xf32, #tpu.memory_space<vmem>>, %arg11: memref<1x1x16xf32, #tpu.memory_space<vmem>>) attributes {dimension_semantics = [#tpu.dimension_semantics<parallel>], iteration_bounds = array<i64: 2>, scalar_prefetch = 0 : i64, scratch_operands = 0 : i64, tpu.core_type = #tpu.core_type<tc>, window_params = [{transform_indices = @transform_0, window_bounds = array<i64: 256, 37>}, {pipeline_mode = #tpu.pipeline_mode<synchronous>, transform_indices = @transform_1, window_bounds = array<i64: 1, 256>}, {pipeline_mode = #tpu.pipeline_mode<synchronous>, transform_indices = @transform_2, window_bounds = array<i64: 37, 8>}, {pipeline_mode = #tpu.pipeline_mode<synchronous>, transform_indices = @transform_3, window_bounds = array<i64: 8, 32>}, {pipeline_mode = #tpu.pipeline_mode<synchronous>, transform_indices = @transform_4, window_bounds = array<i64: 1, 32>}, {pipeline_mode = #tpu.pipeline_mode<synchronous>, transform_indices = @transform_5, window_bounds = array<i64: 32, 64>}, {pipeline_mode = #tpu.pipeline_mode<synchronous>, transform_indices = @transform_6, window_bounds = array<i64: 1, 64>}, {pipeline_mode = #tpu.pipeline_mode<synchronous>, transform_indices = @transform_7, window_bounds = array<i64: 64, 16>}, {pipeline_mode = #tpu.pipeline_mode<synchronous>, transform_indices = @transform_8, window_bounds = array<i64: 1, 16>}, {transform_indices = @transform_9, window_bounds = array<i64: 1, 1, 32>}, {transform_indices = @transform_10, window_bounds = array<i64: 1, 1, 16>}]} {
    %c0 = arith.constant 0 : index
    %c0_0 = arith.constant 0 : index
    %0 = vector.load %arg1[%c0, %c0_0] : memref<256x37xf32, #tpu.memory_space<vmem>>, vector<256x37xf32>
    %c0_1 = arith.constant 0 : index
    %c0_2 = arith.constant 0 : index
    %1 = vector.load %arg3[%c0_1, %c0_2] : memref<37x8xf32, #tpu.memory_space<vmem>>, vector<37x8xf32>
    %cst = arith.constant dense<0.000000e+00> : vector<256x8xf32>
    %2 = tpu.matmul %0, %1, %cst {dimension_numbers = #tpu.dot_dimension_numbers<[1], [0], [0], [1], [0, 0, 1, 1], [], []>} : vector<256x37xf32>, vector<37x8xf32>, vector<256x8xf32> -> vector<256x8xf32>
    %cst_3 = arith.constant 0.000000e+00 : f32
    %3 = vector.broadcast %cst_3 : f32 to vector<256x8xf32>
    %4 = arith.maximumf %2, %3 : vector<256x8xf32>
    %c0_4 = arith.constant 0 : index
    %c0_5 = arith.constant 0 : index
    %5 = vector.load %arg2[%c0_4, %c0_5] : memref<1x256xf32, #tpu.memory_space<vmem>>, vector<1x256xf32>
    %cst_6 = arith.constant dense<0.000000e+00> : vector<1x8xf32>
    %6 = tpu.matmul %5, %4, %cst_6 {dimension_numbers = #tpu.dot_dimension_numbers<[1], [0], [0], [1], [0, 0, 1, 1], [], []>} : vector<1x256xf32>, vector<256x8xf32>, vector<1x8xf32> -> vector<1x8xf32>
    %c0_7 = arith.constant 0 : index
    %c0_8 = arith.constant 0 : index
    %7 = vector.load %arg4[%c0_7, %c0_8] : memref<8x32xf32, #tpu.memory_space<vmem>>, vector<8x32xf32>
    %cst_9 = arith.constant dense<0.000000e+00> : vector<1x32xf32>
    %8 = tpu.matmul %6, %7, %cst_9 {dimension_numbers = #tpu.dot_dimension_numbers<[1], [0], [0], [1], [0, 0, 1, 1], [], []>} : vector<1x8xf32>, vector<8x32xf32>, vector<1x32xf32> -> vector<1x32xf32>
    %c0_10 = arith.constant 0 : index
    %c0_11 = arith.constant 0 : index
    %9 = vector.load %arg5[%c0_10, %c0_11] : memref<1x32xf32, #tpu.memory_space<vmem>>, vector<1x32xf32>
    %10 = arith.addf %8, %9 : vector<1x32xf32>
    %c0_12 = arith.constant 0 : index
    %c0_13 = arith.constant 0 : index
    %11 = vector.load %arg6[%c0_12, %c0_13] : memref<32x64xf32, #tpu.memory_space<vmem>>, vector<32x64xf32>
    %cst_14 = arith.constant dense<0.000000e+00> : vector<1x64xf32>
    %12 = tpu.matmul %10, %11, %cst_14 {dimension_numbers = #tpu.dot_dimension_numbers<[1], [0], [0], [1], [0, 0, 1, 1], [], []>} : vector<1x32xf32>, vector<32x64xf32>, vector<1x64xf32> -> vector<1x64xf32>
    %c0_15 = arith.constant 0 : index
    %c0_16 = arith.constant 0 : index
    %13 = vector.load %arg7[%c0_15, %c0_16] : memref<1x64xf32, #tpu.memory_space<vmem>>, vector<1x64xf32>
    %14 = arith.addf %12, %13 : vector<1x64xf32>
    %cst_17 = arith.constant 0.000000e+00 : f32
    %15 = vector.broadcast %cst_17 : f32 to vector<1x64xf32>
    %16 = arith.maximumf %14, %15 : vector<1x64xf32>
    %c0_18 = arith.constant 0 : index
    %c0_19 = arith.constant 0 : index
    %17 = vector.load %arg8[%c0_18, %c0_19] : memref<64x16xf32, #tpu.memory_space<vmem>>, vector<64x16xf32>
    %cst_20 = arith.constant dense<0.000000e+00> : vector<1x16xf32>
    %18 = tpu.matmul %16, %17, %cst_20 {dimension_numbers = #tpu.dot_dimension_numbers<[1], [0], [0], [1], [0, 0, 1, 1], [], []>} : vector<1x64xf32>, vector<64x16xf32>, vector<1x16xf32> -> vector<1x16xf32>
    %c0_21 = arith.constant 0 : index
    %c0_22 = arith.constant 0 : index
    %19 = vector.load %arg9[%c0_21, %c0_22] : memref<1x16xf32, #tpu.memory_space<vmem>>, vector<1x16xf32>
    %20 = arith.addf %18, %19 : vector<1x16xf32>
    %c0_23 = arith.constant 0 : index
    %c0_24 = arith.constant 0 : index
    %c0_25 = arith.constant 0 : index
    %21 = vector.load %arg10[%c0_23, %c0_24, %c0_25] : memref<1x1x32xf32, #tpu.memory_space<vmem>>, vector<1x1x32xf32>
    %22 = vector.shape_cast %21 : vector<1x1x32xf32> to vector<1x32xf32>
    %23 = vector.shape_cast %10 : vector<1x32xf32> to vector<1x1x32xf32>
    tpu.vector_store %arg10[%c0_23, %c0_24, %c0_25], %23 {strides = array<i32>} : memref<1x1x32xf32, #tpu.memory_space<vmem>>, vector<1x1x32xf32>,
    %c0_26 = arith.constant 0 : index
    %c0_27 = arith.constant 0 : index
    %c0_28 = arith.constant 0 : index
    %24 = vector.load %arg11[%c0_26, %c0_27, %c0_28] : memref<1x1x16xf32, #tpu.memory_space<vmem>>, vector<1x1x16xf32>
    %25 = vector.shape_cast %24 : vector<1x1x16xf32> to vector<1x16xf32>
    %26 = vector.shape_cast %20 : vector<1x16xf32> to vector<1x1x16xf32>
    tpu.vector_store %arg11[%c0_26, %c0_27, %c0_28], %26 {strides = array<i32>} : memref<1x1x16xf32, #tpu.memory_space<vmem>>, vector<1x1x16xf32>,
    return
  }
  func.func @transform_0(%arg0: i32) -> (i32, i32) {
    %c0_i32 = arith.constant 0 : i32
    %c0_i32_0 = arith.constant 0 : i32
    return %arg0, %c0_i32 : i32, i32
  }
  func.func @transform_1(%arg0: i32) -> (i32, i32) {
    %c0_i32 = arith.constant 0 : i32
    %c0_i32_0 = arith.constant 0 : i32
    %c0_i32_1 = arith.constant 0 : i32
    return %c0_i32, %c0_i32_0 : i32, i32
  }
  func.func @transform_2(%arg0: i32) -> (i32, i32) {
    %c0_i32 = arith.constant 0 : i32
    %c0_i32_0 = arith.constant 0 : i32
    %c0_i32_1 = arith.constant 0 : i32
    return %c0_i32, %c0_i32_0 : i32, i32
  }
  func.func @transform_3(%arg0: i32) -> (i32, i32) {
    %c0_i32 = arith.constant 0 : i32
    %c0_i32_0 = arith.constant 0 : i32
    %c0_i32_1 = arith.constant 0 : i32
    return %c0_i32, %c0_i32_0 : i32, i32
  }
  func.func @transform_4(%arg0: i32) -> (i32, i32) {
    %c0_i32 = arith.constant 0 : i32
    %c0_i32_0 = arith.constant 0 : i32
    %c0_i32_1 = arith.constant 0 : i32
    return %c0_i32, %c0_i32_0 : i32, i32
  }
  func.func @transform_5(%arg0: i32) -> (i32, i32) {
    %c0_i32 = arith.constant 0 : i32
    %c0_i32_0 = arith.constant 0 : i32
    %c0_i32_1 = arith.constant 0 : i32
    return %c0_i32, %c0_i32_0 : i32, i32
  }
  func.func @transform_6(%arg0: i32) -> (i32, i32) {
    %c0_i32 = arith.constant 0 : i32
    %c0_i32_0 = arith.constant 0 : i32
    %c0_i32_1 = arith.constant 0 : i32
    return %c0_i32, %c0_i32_0 : i32, i32
  }
  func.func @transform_7(%arg0: i32) -> (i32, i32) {
    %c0_i32 = arith.constant 0 : i32
    %c0_i32_0 = arith.constant 0 : i32
    %c0_i32_1 = arith.constant 0 : i32
    return %c0_i32, %c0_i32_0 : i32, i32
  }
  func.func @transform_8(%arg0: i32) -> (i32, i32) {
    %c0_i32 = arith.constant 0 : i32
    %c0_i32_0 = arith.constant 0 : i32
    %c0_i32_1 = arith.constant 0 : i32
    return %c0_i32, %c0_i32_0 : i32, i32
  }
  func.func @transform_9(%arg0: i32) -> (i32, i32, i32) {
    %c0_i32 = arith.constant 0 : i32
    %c0_i32_0 = arith.constant 0 : i32
    %c0_i32_1 = arith.constant 0 : i32
    return %arg0, %c0_i32, %c0_i32_0 : i32, i32, i32
  }
  func.func @transform_10(%arg0: i32) -> (i32, i32, i32) {
    %c0_i32 = arith.constant 0 : i32
    %c0_i32_0 = arith.constant 0 : i32
    %c0_i32_1 = arith.constant 0 : i32
    return %arg0, %c0_i32, %c0_i32_0 : i32, i32, i32
  }
}

</mosaic_0001>

<llo_original>
// kernel: contrastive_forward.1
$region0: #{contrastive_forward.1}
  #allocation0 [shape = 'u32[]', space=smem, size = 0x4, offset = 0x4, fixed_abs, tag = 'smem constant byte address 0x4 - core index']
  #allocation1 [shape = 'u32[144,128]{1,0:T(1,128)}', space=vmem, size = 0x12000, scoped, tag = 'internal scratch']
  %s0 = inlined_call_operand.vmem [shape: f32[512,37], index: 0, kind: input, shape index: {}]
  %s1 = inlined_call_operand.vmem [shape: f32[1,256], index: 1, kind: input, shape index: {}]
  %s2 = inlined_call_operand.vmem [shape: f32[37,8], index: 2, kind: input, shape index: {}]
  %s3 = inlined_call_operand.vmem [shape: f32[8,32], index: 3, kind: input, shape index: {}]
  %s4 = inlined_call_operand.vmem [shape: f32[1,32], index: 4, kind: input, shape index: {}]
  %s5 = inlined_call_operand.vmem [shape: f32[32,64], index: 5, kind: input, shape index: {}]
  %s6 = inlined_call_operand.vmem [shape: f32[1,64], index: 6, kind: input, shape index: {}]
  %s7 = inlined_call_operand.vmem [shape: f32[64,16], index: 7, kind: input, shape index: {}]
  %s8 = inlined_call_operand.vmem [shape: f32[1,16], index: 8, kind: input, shape index: {}]
  %s9 = inlined_call_operand.hbm [shape: f32[2,1,32], index: 9, kind: output, shape index: {0}]
  %s10 = inlined_call_operand.hbm [shape: f32[2,1,16], index: 10, kind: output, shape index: {1}]
  %11 = xla_tuple %s9, %s10
  %s12 = sld [smem:[#allocation0]]
  $region77: #{contrastive_forward.1} parent=0
    _
  %s14 = ssub.s32 1, %s12
  %s15 = scalar_select 0, %s14, %s12
  $region1: #{contrastive_forward.1} parent=0
    #allocation2 [shape = 'u8[1024]{0}', space=vmem, size = 0x400, scoped, tag = 'output window, operand 0']
    #allocation3 [shape = 's32[2]{0}', space=sflag, size = 0x8, scoped, tag = 'scoped memory for contrastive_forward.1']
    #allocation4 [shape = 'u8[1024]{0}', space=vmem, size = 0x400, scoped, tag = 'output window, operand 1']
    #allocation5 [shape = 's32[2]{0}', space=sflag, size = 0x8, scoped, tag = 'scoped memory for contrastive_forward.1']
    %16 = vsyncpa [#allocation3], 0
    %s17 = scalar_lea.sflag [#allocation3], 1
    %18 = vsyncpa %s17, 0
    %19 = vsyncpa [#allocation5], 0
    %s20 = scalar_lea.sflag [#allocation5], 1
    %21 = vsyncpa %s20, 0
    loop: start=0, step=1, limit=4
    $region2: #{contrastive_forward.1} parent=1 // loop_pre_header
      _
    $region3: #{contrastive_forward.1} parent=1 // loop_header
      %s23 = sphi 0, %s27
      %p24 = scmp.ge.s32.totalorder %s23, 4
      %s33 = sphi 0, %s35
      %s36 = sphi 0, %s33
      %s37 = sphi 0, %s36
      %s53 = sphi 0, %s37
      %s57 = sphi 0, %s57
      %s59 = sphi 0, %s57
      %s60 = sphi 0, %s59
      %s74 = sphi 0, %s60
      %s78 = sphi 0, %s78
      %s80 = sphi 0, %s78
      %s81 = sphi 0, %s80
      %s95 = sphi 0, %s81
      %s99 = sphi 0, %s99
      %s101 = sphi 0, %s99
      %s102 = sphi 0, %s101
      %s116 = sphi 0, %s102
      %s120 = sphi 0, %s120
      %s122 = sphi 0, %s120
      %s123 = sphi 0, %s122
      %s137 = sphi 0, %s123
      %s141 = sphi 0, %s141
      %s143 = sphi 0, %s141
      %s144 = sphi 0, %s143
      %s158 = sphi 0, %s144
      %s162 = sphi 0, %s162
      %s164 = sphi 0, %s162
      %s165 = sphi 0, %s164
      %s179 = sphi 0, %s165
      %s183 = sphi 0, %s183
      %s185 = sphi 0, %s183
      %s186 = sphi 0, %s185
      %s200 = sphi 0, %s186
      %s204 = sphi 0, %s204
      %s206 = sphi 0, %s204
      %s207 = sphi 0, %s206
      %s221 = sphi 0, %s207
      %s227 = sphi 0, %s229
      %s230 = sphi 0, %s227
      %s231 = sphi 0, %s230
      %s247 = sphi 0, %s231
      %s253 = sphi 0, %s255
      %s256 = sphi 0, %s253
      %s257 = sphi 0, %s256
      %s273 = sphi 0, %s257
    $region4: #{contrastive_forward.1} parent=1 // loop_header_branch
      %26 = sbr.rel (%p24) target = $region8
    $region5: #{contrastive_forward.1} parent=1 // loop_body
      %s28 = ssub.s32 %s23, 1
      %s29 = ssub.s32 %s23, 2
      %s30 = sadd.s32 %s23, 1
      %s31 = ssub.s32 %s23, %s30
      %p32 = scmp.eq.s32.totalorder %s31, 0
      %s34 = sadd.s32 %s33, 1
      %s35 = scalar_select %p32, %s33, %s34
      %p38 = pneg %p32
      %p39 = scmp.eq.s32.totalorder %s23, 1
      %p40 = por %p38, %p39
      %p41 = scmp.ne.s32.totalorder %s33, %s36
      %p42 = scmp.eq.s32.totalorder %s23, 0
      %p43 = por %p41, %p42
      %p44 = scmp.ne.s32.totalorder %s33, %s36
      %p45 = scmp.eq.s32.totalorder %s28, 1
      %p46 = por %p44, %p45
      %p47 = scmp.ne.s32.totalorder %s36, %s37
      %p48 = scmp.eq.s32.totalorder %s28, 0
      %p49 = por %p47, %p48
      %p50 = scmp.ne.s32.totalorder %s36, %s37
      %p51 = scmp.eq.s32.totalorder %s29, 1
      %p52 = por %p50, %p51
      %p54 = scmp.ne.s32.totalorder %s37, %s53
      %p55 = scmp.eq.s32.totalorder %s29, 0
      %p56 = por %p54, %p55
      %s58 = sadd.s32 %s57, 1
      %p61 = scmp.eq.s32.totalorder %s23, 1
      %p62 = scmp.ne.s32.totalorder %s57, %s59
      %p63 = scmp.eq.s32.totalorder %s23, 0
      %p64 = por %p62, %p63
      %p65 = scmp.ne.s32.totalorder %s57, %s59
      %p66 = scmp.eq.s32.totalorder %s28, 1
      %p67 = por %p65, %p66
      %p68 = scmp.ne.s32.totalorder %s59, %s60
      %p69 = scmp.eq.s32.totalorder %s28, 0
      %p70 = por %p68, %p69
      %p71 = scmp.ne.s32.totalorder %s59, %s60
      %p72 = scmp.eq.s32.totalorder %s29, 1
      %p73 = por %p71, %p72
      %p75 = scmp.ne.s32.totalorder %s60, %s74
      %p76 = scmp.eq.s32.totalorder %s29, 0
      %p77 = por %p75, %p76
      %s79 = sadd.s32 %s78, 1
      %p82 = scmp.eq.s32.totalorder %s23, 1
      %p83 = scmp.ne.s32.totalorder %s78, %s80
      %p84 = scmp.eq.s32.totalorder %s23, 0
      %p85 = por %p83, %p84
      %p86 = scmp.ne.s32.totalorder %s78, %s80
      %p87 = scmp.eq.s32.totalorder %s28, 1
      %p88 = por %p86, %p87
      %p89 = scmp.ne.s32.totalorder %s80, %s81
      %p90 = scmp.eq.s32.totalorder %s28, 0
      %p91 = por %p89, %p90
      %p92 = scmp.ne.s32.totalorder %s80, %s81
      %p93 = scmp.eq.s32.totalorder %s29, 1
      %p94 = por %p92, %p93
      %p96 = scmp.ne.s32.totalorder %s81, %s95
      %p97 = scmp.eq.s32.totalorder %s29, 0
      %p98 = por %p96, %p97
      %s100 = sadd.s32 %s99, 1
      %p103 = scmp.eq.s32.totalorder %s23, 1
      %p104 = scmp.ne.s32.totalorder %s99, %s101
      %p105 = scmp.eq.s32.totalorder %s23, 0
      %p106 = por %p104, %p105
      %p107 = scmp.ne.s32.totalorder %s99, %s101
      %p108 = scmp.eq.s32.totalorder %s28, 1
      %p109 = por %p107, %p108
      %p110 = scmp.ne.s32.totalorder %s101, %s102
      %p111 = scmp.eq.s32.totalorder %s28, 0
      %p112 = por %p110, %p111
      %p113 = scmp.ne.s32.totalorder %s101, %s102
      %p114 = scmp.eq.s32.totalorder %s29, 1
      %p115 = por %p113, %p114
      %p117 = scmp.ne.s32.totalorder %s102, %s116
      %p118 = scmp.eq.s32.totalorder %s29, 0
      %p119 = por %p117, %p118
      %s121 = sadd.s32 %s120, 1
      %p124 = scmp.eq.s32.totalorder %s23, 1
      %p125 = scmp.ne.s32.totalorder %s120, %s122
      %p126 = scmp.eq.s32.totalorder %s23, 0
      %p127 = por %p125, %p126
      %p128 = scmp.ne.s32.totalorder %s120, %s122
      %p129 = scmp.eq.s32.totalorder %s28, 1
      %p130 = por %p128, %p129
      %p131 = scmp.ne.s32.totalorder %s122, %s123
      %p132 = scmp.eq.s32.totalorder %s28, 0
      %p133 = por %p131, %p132
      %p134 = scmp.ne.s32.totalorder %s122, %s123
      %p135 = scmp.eq.s32.totalorder %s29, 1
      %p136 = por %p134, %p135
      %p138 = scmp.ne.s32.totalorder %s123, %s137
      %p139 = scmp.eq.s32.totalorder %s29, 0
      %p140 = por %p138, %p139
      %s142 = sadd.s32 %s141, 1
      %p145 = scmp.eq.s32.totalorder %s23, 1
      %p146 = scmp.ne.s32.totalorder %s141, %s143
      %p147 = scmp.eq.s32.totalorder %s23, 0
      %p148 = por %p146, %p147
      %p149 = scmp.ne.s32.totalorder %s141, %s143
      %p150 = scmp.eq.s32.totalorder %s28, 1
      %p151 = por %p149, %p150
      %p152 = scmp.ne.s32.totalorder %s143, %s144
      %p153 = scmp.eq.s32.totalorder %s28, 0
      %p154 = por %p152, %p153
      %p155 = scmp.ne.s32.totalorder %s143, %s144
      %p156 = scmp.eq.s32.totalorder %s29, 1
      %p157 = por %p155, %p156
      %p159 = scmp.ne.s32.totalorder %s144, %s158
      %p160 = scmp.eq.s32.totalorder %s29, 0
      %p161 = por %p159, %p160
      %s163 = sadd.s32 %s162, 1
      %p166 = scmp.eq.s32.totalorder %s23, 1
      %p167 = scmp.ne.s32.totalorder %s162, %s164
      %p168 = scmp.eq.s32.totalorder %s23, 0
      %p169 = por %p167, %p168
      %p170 = scmp.ne.s32.totalorder %s162, %s164
      %p171 = scmp.eq.s32.totalorder %s28, 1
      %p172 = por %p170, %p171
      %p173 = scmp.ne.s32.totalorder %s164, %s165
      %p174 = scmp.eq.s32.totalorder %s28, 0
      %p175 = por %p173, %p174
      %p176 = scmp.ne.s32.totalorder %s164, %s165
      %p177 = scmp.eq.s32.totalorder %s29, 1
      %p178 = por %p176, %p177
      %p180 = scmp.ne.s32.totalorder %s165, %s179
      %p181 = scmp.eq.s32.totalorder %s29, 0
      %p182 = por %p180, %p181
      %s184 = sadd.s32 %s183, 1
      %p187 = scmp.eq.s32.totalorder %s23, 1
      %p188 = scmp.ne.s32.totalorder %s183, %s185
      %p189 = scmp.eq.s32.totalorder %s23, 0
      %p190 = por %p188, %p189
      %p191 = scmp.ne.s32.totalorder %s183, %s185
      %p192 = scmp.eq.s32.totalorder %s28, 1
      %p193 = por %p191, %p192
      %p194 = scmp.ne.s32.totalorder %s185, %s186
      %p195 = scmp.eq.s32.totalorder %s28, 0
      %p196 = por %p194, %p195
      %p197 = scmp.ne.s32.totalorder %s185, %s186
      %p198 = scmp.eq.s32.totalorder %s29, 1
      %p199 = por %p197, %p198
      %p201 = scmp.ne.s32.totalorder %s186, %s200
      %p202 = scmp.eq.s32.totalorder %s29, 0
      %p203 = por %p201, %p202
      %s205 = sadd.s32 %s204, 1
      %p208 = scmp.eq.s32.totalorder %s23, 1
      %p209 = scmp.ne.s32.totalorder %s204, %s206
      %p210 = scmp.eq.s32.totalorder %s23, 0
      %p211 = por %p209, %p210
      %p212 = scmp.ne.s32.totalorder %s204, %s206
      %p213 = scmp.eq.s32.totalorder %s28, 1
      %p214 = por %p212, %p213
      %p215 = scmp.ne.s32.totalorder %s206, %s207
      %p216 = scmp.eq.s32.totalorder %s28, 0
      %p217 = por %p215, %p216
      %p218 = scmp.ne.s32.totalorder %s206, %s207
      %p219 = scmp.eq.s32.totalorder %s29, 1
      %p220 = por %p218, %p219
      %p222 = scmp.ne.s32.totalorder %s207, %s221
      %p223 = scmp.eq.s32.totalorder %s29, 0
      %p224 = por %p222, %p223
      %s225 = ssub.s32 %s23, %s30
      %p226 = scmp.eq.s32.totalorder %s225, 0
      %s228 = sadd.s32 %s227, 1
      %s229 = scalar_select %p226, %s227, %s228
      %p232 = pneg %p226
      %p233 = scmp.eq.s32.totalorder %s23, 1
      %p234 = por %p232, %p233
      %p235 = scmp.ne.s32.totalorder %s227, %s230
      %p236 = scmp.eq.s32.totalorder %s23, 0
      %p237 = por %p235, %p236
      %p238 = scmp.ne.s32.totalorder %s227, %s230
      %p239 = scmp.eq.s32.totalorder %s28, 1
      %p240 = por %p238, %p239
      %p241 = scmp.ne.s32.totalorder %s230, %s231
      %p242 = scmp.eq.s32.totalorder %s28, 0
      %p243 = por %p241, %p242
      %p244 = scmp.ne.s32.totalorder %s230, %s231
      %p245 = scmp.eq.s32.totalorder %s29, 1
      %p246 = por %p244, %p245
      %p248 = scmp.ne.s32.totalorder %s231, %s247
      %p249 = scmp.eq.s32.totalorder %s29, 0
      %p250 = por %p248, %p249
      %s251 = ssub.s32 %s23, %s30
      %p252 = scmp.eq.s32.totalorder %s251, 0
      %s254 = sadd.s32 %s253, 1
      %s255 = scalar_select %p252, %s253, %s254
      %p258 = pneg %p252
      %p259 = scmp.eq.s32.totalorder %s23, 1
      %p260 = por %p258, %p259
      %p261 = scmp.ne.s32.totalorder %s253, %s256
      %p262 = scmp.eq.s32.totalorder %s23, 0
      %p263 = por %p261, %p262
      %p264 = scmp.ne.s32.totalorder %s253, %s256
      %p265 = scmp.eq.s32.totalorder %s28, 1
      %p266 = por %p264, %p265
      %p267 = scmp.ne.s32.totalorder %s256, %s257
      %p268 = scmp.eq.s32.totalorder %s28, 0
      %p269 = por %p267, %p268
      %p270 = scmp.ne.s32.totalorder %s256, %s257
      %p271 = scmp.eq.s32.totalorder %s29, 1
      %p272 = por %p270, %p271
      %p274 = scmp.ne.s32.totalorder %s257, %s273
      %p275 = scmp.eq.s32.totalorder %s29, 0
      %p276 = por %p274, %p275
      %p277 = scmp.le.s32.totalorder 1, %s23
      %p278 = scmp.lt.s32.totalorder %s23, 3
      %p279 = pnand %p277, %p278
      %p280 = pneg %p279
      // Predicated region
      $region9: #{contrastive_forward.1} parent=5 // pred_check
        _
      $region10: #{contrastive_forward.1} parent=5 // pred_check_branch
        %282 = sbr.rel (%p279) target = $region12
      $region11: #{contrastive_forward.1} parent=5 // pred_region
        %s283 = ssub.s32 %s23, 1
        // Predicated region
        $region13: #{contrastive_forward.1} parent=11 // pred_check
          %p284 = pneg %p70
        $region14: #{contrastive_forward.1} parent=11 // pred_check_branch
          %286 = sbr.rel (%p284) target = $region16
        $region15: #{contrastive_forward.1} parent=11 // pred_region
          _
        $region16: #{contrastive_forward.1} parent=11 // pred_fallthru
          _
        // Predicated region
        $region17: #{contrastive_forward.1} parent=11 // pred_check
          %p287 = pneg %p91
        $region18: #{contrastive_forward.1} parent=11 // pred_check_branch
          %289 = sbr.rel (%p287) target = $region20
        $region19: #{contrastive_forward.1} parent=11 // pred_region
          _
        $region20: #{contrastive_forward.1} parent=11 // pred_fallthru
          _
        // Predicated region
        $region21: #{contrastive_forward.1} parent=11 // pred_check
          %p290 = pneg %p112
        $region22: #{contrastive_forward.1} parent=11 // pred_check_branch
          %292 = sbr.rel (%p290) target = $region24
        $region23: #{contrastive_forward.1} parent=11 // pred_region
          _
        $region24: #{contrastive_forward.1} parent=11 // pred_fallthru
          _
        // Predicated region
        $region25: #{contrastive_forward.1} parent=11 // pred_check
          %p293 = pneg %p133
        $region26: #{contrastive_forward.1} parent=11 // pred_check_branch
          %295 = sbr.rel (%p293) target = $region28
        $region27: #{contrastive_forward.1} parent=11 // pred_region
          _
        $region28: #{contrastive_forward.1} parent=11 // pred_fallthru
          _
        // Predicated region
        $region29: #{contrastive_forward.1} parent=11 // pred_check
          %p296 = pneg %p154
        $region30: #{contrastive_forward.1} parent=11 // pred_check_branch
          %298 = sbr.rel (%p296) target = $region32
        $region31: #{contrastive_forward.1} parent=11 // pred_region
          _
        $region32: #{contrastive_forward.1} parent=11 // pred_fallthru
          _
        // Predicated region
        $region33: #{contrastive_forward.1} parent=11 // pred_check
          %p299 = pneg %p175
        $region34: #{contrastive_forward.1} parent=11 // pred_check_branch
          %301 = sbr.rel (%p299) target = $region36
        $region35: #{contrastive_forward.1} parent=11 // pred_region
          _
        $region36: #{contrastive_forward.1} parent=11 // pred_fallthru
          _
        // Predicated region
        $region37: #{contrastive_forward.1} parent=11 // pred_check
          %p302 = pneg %p196
        $region38: #{contrastive_forward.1} parent=11 // pred_check_branch
          %304 = sbr.rel (%p302) target = $region40
        $region39: #{contrastive_forward.1} parent=11 // pred_region
          _
        $region40: #{contrastive_forward.1} parent=11 // pred_fallthru
          _
        // Predicated region
        $region41: #{contrastive_forward.1} parent=11 // pred_check
          %p305 = pneg %p217
        $region42: #{contrastive_forward.1} parent=11 // pred_check_branch
          %307 = sbr.rel (%p305) target = $region44
        $region43: #{contrastive_forward.1} parent=11 // pred_region
          _
        $region44: #{contrastive_forward.1} parent=11 // pred_fallthru
          _
      $region12: #{contrastive_forward.1} parent=5 // pred_fallthru
        _
      %p308 = scmp.lt.s32.totalorder %s23, 2
      // Predicated region
      $region45: #{contrastive_forward.1} parent=5 // pred_check
        %p309 = pneg %p308
      $region46: #{contrastive_forward.1} parent=5 // pred_check_branch
        %311 = sbr.rel (%p309) target = $region48
      $region47: #{contrastive_forward.1} parent=5 // pred_region
        // Predicated region
        $region49: #{contrastive_forward.1} parent=47 // pred_check
          %p312 = pneg %p43
        $region50: #{contrastive_forward.1} parent=47 // pred_check_branch
          %314 = sbr.rel (%p312) target = $region52
        $region51: #{contrastive_forward.1} parent=47 // pred_region
          %s315 = smul.u32 32, %s23
          %p316 = scmp.lt.s32.totalorder %s315, 63
          %s317 = scalar_select %p316, %s315, 63
          %s318 = smul.addr %s317, 8
          %s319 = scalar_lea.vmem %s0, %s318
          %s320 = smul.u32 32, %s23
        $region52: #{contrastive_forward.1} parent=47 // pred_fallthru
          _
      $region48: #{contrastive_forward.1} parent=5 // pred_fallthru
        _
      %p321 = scmp.le.s32.totalorder 1, %s23
      %p322 = scmp.lt.s32.totalorder %s23, 3
      %p323 = pnand %p321, %p322
      %p324 = pneg %p323
      // Predicated region
      $region53: #{contrastive_forward.1} parent=5 // pred_check
        _
      $region54: #{contrastive_forward.1} parent=5 // pred_check_branch
        %326 = sbr.rel (%p323) target = $region56
      $region55: #{contrastive_forward.1} parent=5 // pred_region
        %s327 = ssub.s32 %s23, 1
        %s328 = smul.u32 32, %s28
        %p329 = scmp.lt.s32.totalorder %s328, 63
        %s330 = scalar_select %p329, %s328, 63
        %s331 = smul.addr %s330, 8
        %s332 = scalar_lea.vmem %s0, %s331
        %p333 = pneg %p49
        %p334 = pneg %p46
        %p335 = pneg %p70
        %p336 = pneg %p67
        %p337 = pneg %p91
        %p338 = pneg %p88
        %p339 = pneg %p112
        %p340 = pneg %p109
        %p341 = pneg %p133
        %p342 = pneg %p130
        %p343 = pneg %p154
        %p344 = pneg %p151
        %p345 = pneg %p175
        %p346 = pneg %p172
        %p347 = pneg %p196
        %p348 = pneg %p193
        %p349 = pneg %p217
        %p350 = pneg %p214
        %p351 = pneg %p243
        %p352 = pneg %p240
        %s353 = sand.u32 %s230, 1
        %s354 = scalar_lea.sflag [#allocation3], %s353
        %s355 = sand.u32 %s230, 1
        %s356 = scalar_lea.vmem [#allocation2], %s355
        %p357 = pneg %p269
        %p358 = pneg %p266
        %s359 = sand.u32 %s256, 1
        %s360 = scalar_lea.sflag [#allocation5], %s359
        %s361 = sand.u32 %s256, 1
        %s362 = scalar_lea.vmem [#allocation4], %s361
        %s363 = smul.u32 32, %s28
        %p364 = scmp.lt.s32.totalorder %s363, 63
        %s365 = scalar_select %p364, %s363, 63
        %s366 = smul.addr %s365, 8
        %s367 = scalar_lea.vmem %s0, %s366
        %s368 = smul.u32 32, %s28
        %v369 = vld [vmem:[%s367] sm:$0xff]
        %v370 = vld [vmem:[%s367 + $0x8] sm:$0xff]
        %v371 = vld [vmem:[%s367 + $0x10] sm:$0xff]
        %v372 = vld [vmem:[%s367 + $0x18] sm:$0xff]
        %v373 = vld [vmem:[%s367 + $0x20] sm:$0xff]
        %v374 = vld [vmem:[%s367 + $0x28] sm:$0xff]
        %v375 = vld [vmem:[%s367 + $0x30] sm:$0xff]
        %v376 = vld [vmem:[%s367 + $0x38] sm:$0xff]
        %v377 = vld [vmem:[%s367 + $0x40] sm:$0xff]
        %v378 = vld [vmem:[%s367 + $0x48] sm:$0xff]
        %v379 = vld [vmem:[%s367 + $0x50] sm:$0xff]
        %v380 = vld [vmem:[%s367 + $0x58] sm:$0xff]
        %v381 = vld [vmem:[%s367 + $0x60] sm:$0xff]
        %v382 = vld [vmem:[%s367 + $0x68] sm:$0xff]
        %v383 = vld [vmem:[%s367 + $0x70] sm:$0xff]
        %v384 = vld [vmem:[%s367 + $0x78] sm:$0xff]
        %v385 = vld [vmem:[%s367 + $0x80] sm:$0xff]
        %v386 = vld [vmem:[%s367 + $0x88] sm:$0xff]
        %v387 = vld [vmem:[%s367 + $0x90] sm:$0xff]
        %v388 = vld [vmem:[%s367 + $0x98] sm:$0xff]
        %v389 = vld [vmem:[%s367 + $0xa0] sm:$0xff]
        %v390 = vld [vmem:[%s367 + $0xa8] sm:$0xff]
        %v391 = vld [vmem:[%s367 + $0xb0] sm:$0xff]
        %v392 = vld [vmem:[%s367 + $0xb8] sm:$0xff]
        %v393 = vld [vmem:[%s367 + $0xc0] sm:$0xff]
        %v394 = vld [vmem:[%s367 + $0xc8] sm:$0xff]
        %v395 = vld [vmem:[%s367 + $0xd0] sm:$0xff]
        %v396 = vld [vmem:[%s367 + $0xd8] sm:$0xff]
        %v397 = vld [vmem:[%s367 + $0xe0] sm:$0xff]
        %v398 = vld [vmem:[%s367 + $0xe8] sm:$0xff]
        %v399 = vld [vmem:[%s367 + $0xf0] sm:$0xff]
        %v400 = vld [vmem:[%s367 + $0xf8] sm:$0xff]
        %v401 = vld [vmem:[%s2] sm:$0xff]
        %v402 = vld [vmem:[%s2 + $0x8] sm:$0xff]
        %v403 = vld [vmem:[%s2 + $0x10] sm:$0xff]
        %v404 = vld [vmem:[%s2 + $0x18] sm:$0xff]
        %v405 = vld [vmem:[%s2 + $0x20] sm:$0x1f]
        %vm406 = vcmask 302080
        %v408 = vsel %vm406, %v369, 0
        %v411 = vsel %vm406, %v370, 0
        %v414 = vsel %vm406, %v371, 0
        %v417 = vsel %vm406, %v372, 0
        %v420 = vsel %vm406, %v373, 0
        %v423 = vsel %vm406, %v374, 0
        %v426 = vsel %vm406, %v375, 0
        %v429 = vsel %vm406, %v376, 0
        %v432 = vsel %vm406, %v377, 0
        %v435 = vsel %vm406, %v378, 0
        %v438 = vsel %vm406, %v379, 0
        %v441 = vsel %vm406, %v380, 0
        %v444 = vsel %vm406, %v381, 0
        %v447 = vsel %vm406, %v382, 0
        %v450 = vsel %vm406, %v383, 0
        %v453 = vsel %vm406, %v384, 0
        %v456 = vsel %vm406, %v385, 0
        %v459 = vsel %vm406, %v386, 0
        %v462 = vsel %vm406, %v387, 0
        %v465 = vsel %vm406, %v388, 0
        %v468 = vsel %vm406, %v389, 0
        %v471 = vsel %vm406, %v390, 0
        %v474 = vsel %vm406, %v391, 0
        %v477 = vsel %vm406, %v392, 0
        %v480 = vsel %vm406, %v393, 0
        %v483 = vsel %vm406, %v394, 0
        %v486 = vsel %vm406, %v395, 0
        %v489 = vsel %vm406, %v396, 0
        %v492 = vsel %vm406, %v397, 0
        %v495 = vsel %vm406, %v398, 0
        %v498 = vsel %vm406, %v399, 0
        %v501 = vsel %vm406, %v400, 0
        %vm503 = vcmask 1044480
        %v505 = vsel %vm503, %v405, 0
        %507 = vmatprep.subr.mxu0 0.0
        %508 = vmatpush1.msra.mxu0 %v401
        %509 = vmatprep.subr.mxu0 0.0
        %510 = vmatpush1.msra.mxu0 %v402
        %511 = vmatprep.subr.mxu0 0.0
        %512 = vmatpush1.msra.mxu0 %v403
        %513 = vmatprep.subr.mxu0 0.0
        %514 = vmatpush1.msra.mxu0 %v404
        %515 = vmatprep.subr.mxu0 0.0
        %516 = vmatpush1.msra.mxu0 %v505
        %517 = vmatprep.subr.mxu0 0.0
        %518 = vmatpush1.msra.mxu0 0.0
        %519 = vmatprep.subr.mxu0 0.0
        %520 = vmatpush1.msra.mxu0 0.0
        %521 = vmatprep.subr.mxu0 0.0
        %522 = vmatpush1.msra.mxu0 0.0
        %523 = vmatprep.subr.mxu0 0.0
        %524 = vmatpush1.msra.mxu0 0.0
        %525 = vmatprep.subr.mxu0 0.0
        %526 = vmatpush1.msra.mxu0 0.0
        %527 = vmatprep.subr.mxu0 0.0
        %528 = vmatpush1.msra.mxu0 0.0
        %529 = vmatprep.subr.mxu0 0.0
        %530 = vmatpush1.msra.mxu0 0.0
        %531 = vmatprep.subr.mxu0 0.0
        %532 = vmatpush1.msra.mxu0 0.0
        %533 = vmatprep.subr.mxu0 0.0
        %534 = vmatpush1.msra.mxu0 0.0
        %535 = vmatprep.subr.mxu0 0.0
        %536 = vmatpush1.msra.mxu0 0.0
        %537 = vmatprep.subr.mxu0 0.0
        %538 = vmatpush1.msra.mxu0 0.0
        %539 = vmatprep.subr.mxu0 0.0
        %540 = vmatpush1.msra.mxu0 0.0
        %541 = vmatprep.subr.mxu0 0.0
        %542 = vmatpush1.msra.mxu0 0.0
        %543 = vmatprep.subr.mxu0 0.0
        %544 = vmatpush1.msra.mxu0 0.0
        %545 = vmatprep.subr.mxu0 0.0
        %546 = vmatpush1.msra.mxu0 0.0
        %547 = vmatprep.subr.mxu0 0.0
        %548 = vmatpush1.msra.mxu0 0.0
        %549 = vmatprep.subr.mxu0 0.0
        %550 = vmatpush1.msra.mxu0 0.0
        %551 = vmatprep.subr.mxu0 0.0
        %552 = vmatpush1.msra.mxu0 0.0
        %553 = vmatprep.subr.mxu0 0.0
        %554 = vmatpush1.msra.mxu0 0.0
        %555 = vmatprep.subr.mxu0 0.0
        %556 = vmatpush1.msra.mxu0 0.0
        %557 = vmatprep.subr.mxu0 0.0
        %558 = vmatpush1.msra.mxu0 0.0
        %559 = vmatprep.subr.mxu0 0.0
        %560 = vmatpush1.msra.mxu0 0.0
        %561 = vmatprep.subr.mxu0 0.0
        %562 = vmatpush1.msra.mxu0 0.0
        %563 = vmatprep.subr.mxu0 0.0
        %564 = vmatpush1.msra.mxu0 0.0
        %565 = vmatprep.subr.mxu0 0.0
        %566 = vmatpush1.msra.mxu0 0.0
        %567 = vmatprep.subr.mxu0 0.0
        %568 = vmatpush1.msra.mxu0 0.0
        %569 = vmatprep.subr.mxu0 0.0
        %570 = vmatpush1.msra.mxu0 0.0
        %571 = vmatprep.mubr.f32.mxu0 0.0
        %572 = vmatmul.mubr.f32.gmra.mrb[0].mxu0 %v408
        %v573 = vpop.f32.mrb[0].mxu0
        %v574 = vadd.f32 0.0, %v573
        %v575 = vpop.f32.mrb[0].mxu0
        %576 = vmatprep.mubr.f32.mxu0 0.0
        %577 = vmatmul.mubr.f32.gmra.mrb[0].mxu0 %v411
        %v578 = vpop.f32.mrb[0].mxu0
        %v579 = vadd.f32 0.0, %v578
        %v580 = vpop.f32.mrb[0].mxu0
        %581 = vmatprep.mubr.f32.mxu0 0.0
        %582 = vmatmul.mubr.f32.gmra.mrb[0].mxu0 %v414
        %v583 = vpop.f32.mrb[0].mxu0
        %v584 = vadd.f32 0.0, %v583
        %v585 = vpop.f32.mrb[0].mxu0
        %586 = vmatprep.mubr.f32.mxu0 0.0
        %587 = vmatmul.mubr.f32.gmra.mrb[0].mxu0 %v417
        %v588 = vpop.f32.mrb[0].mxu0
        %v589 = vadd.f32 0.0, %v588
        %v590 = vpop.f32.mrb[0].mxu0
        %591 = vmatprep.mubr.f32.mxu0 0.0
        %592 = vmatmul.mubr.f32.gmra.mrb[0].mxu0 %v420
        %v593 = vpop.f32.mrb[0].mxu0
        %v594 = vadd.f32 0.0, %v593
        %v595 = vpop.f32.mrb[0].mxu0
        %596 = vmatprep.mubr.f32.mxu0 0.0
        %597 = vmatmul.mubr.f32.gmra.mrb[0].mxu0 %v423
        %v598 = vpop.f32.mrb[0].mxu0
        %v599 = vadd.f32 0.0, %v598
        %v600 = vpop.f32.mrb[0].mxu0
        %601 = vmatprep.mubr.f32.mxu0 0.0
        %602 = vmatmul.mubr.f32.gmra.mrb[0].mxu0 %v426
        %v603 = vpop.f32.mrb[0].mxu0
        %v604 = vadd.f32 0.0, %v603
        %v605 = vpop.f32.mrb[0].mxu0
        %606 = vmatprep.mubr.f32.mxu0 0.0
        %607 = vmatmul.mubr.f32.gmra.mrb[0].mxu0 %v429
        %v608 = vpop.f32.mrb[0].mxu0
        %v609 = vadd.f32 0.0, %v608
        %v610 = vpop.f32.mrb[0].mxu0
        %611 = vmatprep.mubr.f32.mxu0 0.0
        %612 = vmatmul.mubr.f32.gmra.mrb[0].mxu0 %v432
        %v613 = vpop.f32.mrb[0].mxu0
        %v614 = vadd.f32 0.0, %v613
        %v615 = vpop.f32.mrb[0].mxu0
        %616 = vmatprep.mubr.f32.mxu0 0.0
        %617 = vmatmul.mubr.f32.gmra.mrb[0].mxu0 %v435
        %v618 = vpop.f32.mrb[0].mxu0
        %v619 = vadd.f32 0.0, %v618
        %v620 = vpop.f32.mrb[0].mxu0
        %621 = vmatprep.mubr.f32.mxu0 0.0
        %622 = vmatmul.mubr.f32.gmra.mrb[0].mxu0 %v438
        %v623 = vpop.f32.mrb[0].mxu0
        %v624 = vadd.f32 0.0, %v623
        %v625 = vpop.f32.mrb[0].mxu0
        %626 = vmatprep.mubr.f32.mxu0 0.0
        %627 = vmatmul.mubr.f32.gmra.mrb[0].mxu0 %v441
        %v628 = vpop.f32.mrb[0].mxu0
        %v629 = vadd.f32 0.0, %v628
        %v630 = vpop.f32.mrb[0].mxu0
        %631 = vmatprep.mubr.f32.mxu0 0.0
        %632 = vmatmul.mubr.f32.gmra.mrb[0].mxu0 %v444
        %v633 = vpop.f32.mrb[0].mxu0
        %v634 = vadd.f32 0.0, %v633
        %v635 = vpop.f32.mrb[0].mxu0
        %636 = vmatprep.mubr.f32.mxu0 0.0
        %637 = vmatmul.mubr.f32.gmra.mrb[0].mxu0 %v447
        %v638 = vpop.f32.mrb[0].mxu0
        %v639 = vadd.f32 0.0, %v638
        %v640 = vpop.f32.mrb[0].mxu0
        %641 = vmatprep.mubr.f32.mxu0 0.0
        %642 = vmatmul.mubr.f32.gmra.mrb[0].mxu0 %v450
        %v643 = vpop.f32.mrb[0].mxu0
        %v644 = vadd.f32 0.0, %v643
        %v645 = vpop.f32.mrb[0].mxu0
        %646 = vmatprep.mubr.f32.mxu0 0.0
        %647 = vmatmul.mubr.f32.gmra.mrb[0].mxu0 %v453
        %v648 = vpop.f32.mrb[0].mxu0
        %v649 = vadd.f32 0.0, %v648
        %v650 = vpop.f32.mrb[0].mxu0
        %651 = vmatprep.mubr.f32.mxu0 0.0
        %652 = vmatmul.mubr.f32.gmra.mrb[0].mxu0 %v456
        %v653 = vpop.f32.mrb[0].mxu0
        %v654 = vadd.f32 0.0, %v653
        %v655 = vpop.f32.mrb[0].mxu0
        %656 = vmatprep.mubr.f32.mxu0 0.0
        %657 = vmatmul.mubr.f32.gmra.mrb[0].mxu0 %v459
        %v658 = vpop.f32.mrb[0].mxu0
        %v659 = vadd.f32 0.0, %v658
        %v660 = vpop.f32.mrb[0].mxu0
        %661 = vmatprep.mubr.f32.mxu0 0.0
        %662 = vmatmul.mubr.f32.gmra.mrb[0].mxu0 %v462
        %v663 = vpop.f32.mrb[0].mxu0
        %v664 = vadd.f32 0.0, %v663
        %v665 = vpop.f32.mrb[0].mxu0
        %666 = vmatprep.mubr.f32.mxu0 0.0
        %667 = vmatmul.mubr.f32.gmra.mrb[0].mxu0 %v465
        %v668 = vpop.f32.mrb[0].mxu0
        %v669 = vadd.f32 0.0, %v668
        %v670 = vpop.f32.mrb[0].mxu0
        %671 = vmatprep.mubr.f32.mxu0 0.0
        %672 = vmatmul.mubr.f32.gmra.mrb[0].mxu0 %v468
        %v673 = vpop.f32.mrb[0].mxu0
        %v674 = vadd.f32 0.0, %v673
        %v675 = vpop.f32.mrb[0].mxu0
        %676 = vmatprep.mubr.f32.mxu0 0.0
        %677 = vmatmul.mubr.f32.gmra.mrb[0].mxu0 %v471
        %v678 = vpop.f32.mrb[0].mxu0
        %v679 = vadd.f32 0.0, %v678
        %v680 = vpop.f32.mrb[0].mxu0
        %681 = vmatprep.mubr.f32.mxu0 0.0
        %682 = vmatmul.mubr.f32.gmra.mrb[0].mxu0 %v474
        %v683 = vpop.f32.mrb[0].mxu0
        %v684 = vadd.f32 0.0, %v683
        %v685 = vpop.f32.mrb[0].mxu0
        %686 = vmatprep.mubr.f32.mxu0 0.0
        %687 = vmatmul.mubr.f32.gmra.mrb[0].mxu0 %v477
        %v688 = vpop.f32.mrb[0].mxu0
        %v689 = vadd.f32 0.0, %v688
        %v690 = vpop.f32.mrb[0].mxu0
        %691 = vmatprep.mubr.f32.mxu0 0.0
        %692 = vmatmul.mubr.f32.gmra.mrb[0].mxu0 %v480
        %v693 = vpop.f32.mrb[0].mxu0
        %v694 = vadd.f32 0.0, %v693
        %v695 = vpop.f32.mrb[0].mxu0
        %696 = vmatprep.mubr.f32.mxu0 0.0
        %697 = vmatmul.mubr.f32.gmra.mrb[0].mxu0 %v483
        %v698 = vpop.f32.mrb[0].mxu0
        %v699 = vadd.f32 0.0, %v698
        %v700 = vpop.f32.mrb[0].mxu0
        %701 = vmatprep.mubr.f32.mxu0 0.0
        %702 = vmatmul.mubr.f32.gmra.mrb[0].mxu0 %v486
        %v703 = vpop.f32.mrb[0].mxu0
        %v704 = vadd.f32 0.0, %v703
        %v705 = vpop.f32.mrb[0].mxu0
        %706 = vmatprep.mubr.f32.mxu0 0.0
        %707 = vmatmul.mubr.f32.gmra.mrb[0].mxu0 %v489
        %v708 = vpop.f32.mrb[0].mxu0
        %v709 = vadd.f32 0.0, %v708
        %v710 = vpop.f32.mrb[0].mxu0
        %711 = vmatprep.mubr.f32.mxu0 0.0
        %712 = vmatmul.mubr.f32.gmra.mrb[0].mxu0 %v492
        %v713 = vpop.f32.mrb[0].mxu0
        %v714 = vadd.f32 0.0, %v713
        %v715 = vpop.f32.mrb[0].mxu0
        %716 = vmatprep.mubr.f32.mxu0 0.0
        %717 = vmatmul.mubr.f32.gmra.mrb[0].mxu0 %v495
        %v718 = vpop.f32.mrb[0].mxu0
        %v719 = vadd.f32 0.0, %v718
        %v720 = vpop.f32.mrb[0].mxu0
        %721 = vmatprep.mubr.f32.mxu0 0.0
        %722 = vmatmul.mubr.f32.gmra.mrb[0].mxu0 %v498
        %v723 = vpop.f32.mrb[0].mxu0
        %v724 = vadd.f32 0.0, %v723
        %v725 = vpop.f32.mrb[0].mxu0
        %726 = vmatprep.mubr.f32.mxu0 0.0
        %727 = vmatmul.mubr.f32.gmra.mrb[0].mxu0 %v501
        %v728 = vpop.f32.mrb[0].mxu0
        %v729 = vadd.f32 0.0, %v728
        %v730 = vpop.f32.mrb[0].mxu0
        %731 = vdwg.mxu0
        %v732 = vmax.f32 %v574, 0.0
        %v733 = vmax.f32 %v579, 0.0
        %v734 = vmax.f32 %v584, 0.0
        %v735 = vmax.f32 %v589, 0.0
        %v736 = vmax.f32 %v594, 0.0
        %v737 = vmax.f32 %v599, 0.0
        %v738 = vmax.f32 %v604, 0.0
        %v739 = vmax.f32 %v609, 0.0
        %v740 = vmax.f32 %v614, 0.0
        %v741 = vmax.f32 %v619, 0.0
        %v742 = vmax.f32 %v624, 0.0
        %v743 = vmax.f32 %v629, 0.0
        %v744 = vmax.f32 %v634, 0.0
        %v745 = vmax.f32 %v639, 0.0
        %v746 = vmax.f32 %v644, 0.0
        %v747 = vmax.f32 %v649, 0.0
        %v748 = vmax.f32 %v654, 0.0
        %v749 = vmax.f32 %v659, 0.0
        %v750 = vmax.f32 %v664, 0.0
        %v751 = vmax.f32 %v669, 0.0
        %v752 = vmax.f32 %v674, 0.0
        %v753 = vmax.f32 %v679, 0.0
        %v754 = vmax.f32 %v684, 0.0
        %v755 = vmax.f32 %v689, 0.0
        %v756 = vmax.f32 %v694, 0.0
        %v757 = vmax.f32 %v699, 0.0
        %v758 = vmax.f32 %v704, 0.0
        %v759 = vmax.f32 %v709, 0.0
        %v760 = vmax.f32 %v714, 0.0
        %v761 = vmax.f32 %v719, 0.0
        %v762 = vmax.f32 %v724, 0.0
        %v763 = vmax.f32 %v729, 0.0
        %v764 = vld [vmem:[%s1] sm:$0x3]
        %v766 = vlaneseq
        %v767 = vshrl.u32 %v766, 7
        %v768 = vsub.s32 0, %v767
        %v769 = vrot.slane %v764, %v768
        %v770 = vlaneseq
        %v771 = vshrl.u32 %v770, 7
        %v772 = vsub.s32 1, %v771
        %v773 = vrot.slane %v764, %v772
        %776 = vmatprep.subr.mxu0 0.0
        %777 = vmatpush1.msra.mxu0 %v732
        %778 = vmatprep.subr.mxu0 0.0
        %779 = vmatpush1.msra.mxu0 %v733
        %780 = vmatprep.subr.mxu0 0.0
        %781 = vmatpush1.msra.mxu0 %v734
        %782 = vmatprep.subr.mxu0 0.0
        %783 = vmatpush1.msra.mxu0 %v735
        %784 = vmatprep.subr.mxu0 0.0
        %785 = vmatpush1.msra.mxu0 %v736
        %786 = vmatprep.subr.mxu0 0.0
        %787 = vmatpush1.msra.mxu0 %v737
        %788 = vmatprep.subr.mxu0 0.0
        %789 = vmatpush1.msra.mxu0 %v738
        %790 = vmatprep.subr.mxu0 0.0
        %791 = vmatpush1.msra.mxu0 %v739
        %792 = vmatprep.subr.mxu0 0.0
        %793 = vmatpush1.msra.mxu0 %v740
        %794 = vmatprep.subr.mxu0 0.0
        %795 = vmatpush1.msra.mxu0 %v741
        %796 = vmatprep.subr.mxu0 0.0
        %797 = vmatpush1.msra.mxu0 %v742
        %798 = vmatprep.subr.mxu0 0.0
        %799 = vmatpush1.msra.mxu0 %v743
        %800 = vmatprep.subr.mxu0 0.0
        %801 = vmatpush1.msra.mxu0 %v744
        %802 = vmatprep.subr.mxu0 0.0
        %803 = vmatpush1.msra.mxu0 %v745
        %804 = vmatprep.subr.mxu0 0.0
        %805 = vmatpush1.msra.mxu0 %v746
        %806 = vmatprep.subr.mxu0 0.0
        %807 = vmatpush1.msra.mxu0 %v747
        %808 = vmatprep.subr.mxu0 0.0
        %809 = vmatpush1.msra.mxu0 %v748
        %810 = vmatprep.subr.mxu0 0.0
        %811 = vmatpush1.msra.mxu0 %v749
        %812 = vmatprep.subr.mxu0 0.0
        %813 = vmatpush1.msra.mxu0 %v750
        %814 = vmatprep.subr.mxu0 0.0
        %815 = vmatpush1.msra.mxu0 %v751
        %816 = vmatprep.subr.mxu0 0.0
        %817 = vmatpush1.msra.mxu0 %v752
        %818 = vmatprep.subr.mxu0 0.0
        %819 = vmatpush1.msra.mxu0 %v753
        %820 = vmatprep.subr.mxu0 0.0
        %821 = vmatpush1.msra.mxu0 %v754
        %822 = vmatprep.subr.mxu0 0.0
        %823 = vmatpush1.msra.mxu0 %v755
        %824 = vmatprep.subr.mxu0 0.0
        %825 = vmatpush1.msra.mxu0 %v756
        %826 = vmatprep.subr.mxu0 0.0
        %827 = vmatpush1.msra.mxu0 %v757
        %828 = vmatprep.subr.mxu0 0.0
        %829 = vmatpush1.msra.mxu0 %v758
        %830 = vmatprep.subr.mxu0 0.0
        %831 = vmatpush1.msra.mxu0 %v759
        %832 = vmatprep.subr.mxu0 0.0
        %833 = vmatpush1.msra.mxu0 %v760
        %834 = vmatprep.subr.mxu0 0.0
        %835 = vmatpush1.msra.mxu0 %v761
        %836 = vmatprep.subr.mxu0 0.0
        %837 = vmatpush1.msra.mxu0 %v762
        %838 = vmatprep.subr.mxu0 0.0
        %839 = vmatpush1.msra.mxu0 %v763
        %840 = vmatprep.mubr.f32.mxu0 %v773
        %841 = vmatmul.mubr.f32.gmra.mrb[0].mxu0 %v769
        %v842 = vpop.f32.mrb[0].mxu0
        %v843 = vadd.f32 0.0, %v842
        %v844 = vpop.f32.mrb[0].mxu0
        %845 = vdwg.mxu0
        %v846 = vld [vmem:[%s3] sm:$0xff]
        %v847 = vld [vmem:[%s4] sm:$0x1]
        %vm848 = vcmask 64512
        %v850 = vsel %vm848, %v843, 0
        %852 = vmatprep.subr.mxu0 0.0
        %853 = vmatpush1.msra.mxu0 %v846
        %854 = vmatprep.subr.mxu0 0.0
        %855 = vmatpush1.msra.mxu0 0.0
        %856 = vmatprep.subr.mxu0 0.0
        %857 = vmatpush1.msra.mxu0 0.0
        %858 = vmatprep.subr.mxu0 0.0
        %859 = vmatpush1.msra.mxu0 0.0
        %860 = vmatprep.subr.mxu0 0.0
        %861 = vmatpush1.msra.mxu0 0.0
        %862 = vmatprep.subr.mxu0 0.0
        %863 = vmatpush1.msra.mxu0 0.0
        %864 = vmatprep.subr.mxu0 0.0
        %865 = vmatpush1.msra.mxu0 0.0
        %866 = vmatprep.subr.mxu0 0.0
        %867 = vmatpush1.msra.mxu0 0.0
        %868 = vmatprep.subr.mxu0 0.0
        %869 = vmatpush1.msra.mxu0 0.0
        %870 = vmatprep.subr.mxu0 0.0
        %871 = vmatpush1.msra.mxu0 0.0
        %872 = vmatprep.subr.mxu0 0.0
        %873 = vmatpush1.msra.mxu0 0.0
        %874 = vmatprep.subr.mxu0 0.0
        %875 = vmatpush1.msra.mxu0 0.0
        %876 = vmatprep.subr.mxu0 0.0
        %877 = vmatpush1.msra.mxu0 0.0
        %878 = vmatprep.subr.mxu0 0.0
        %879 = vmatpush1.msra.mxu0 0.0
        %880 = vmatprep.subr.mxu0 0.0
        %881 = vmatpush1.msra.mxu0 0.0
        %882 = vmatprep.subr.mxu0 0.0
        %883 = vmatpush1.msra.mxu0 0.0
        %884 = vmatprep.subr.mxu0 0.0
        %885 = vmatpush1.msra.mxu0 0.0
        %886 = vmatprep.subr.mxu0 0.0
        %887 = vmatpush1.msra.mxu0 0.0
        %888 = vmatprep.subr.mxu0 0.0
        %889 = vmatpush1.msra.mxu0 0.0
        %890 = vmatprep.subr.mxu0 0.0
        %891 = vmatpush1.msra.mxu0 0.0
        %892 = vmatprep.subr.mxu0 0.0
        %893 = vmatpush1.msra.mxu0 0.0
        %894 = vmatprep.subr.mxu0 0.0
        %895 = vmatpush1.msra.mxu0 0.0
        %896 = vmatprep.subr.mxu0 0.0
        %897 = vmatpush1.msra.mxu0 0.0
        %898 = vmatprep.subr.mxu0 0.0
        %899 = vmatpush1.msra.mxu0 0.0
        %900 = vmatprep.subr.mxu0 0.0
        %901 = vmatpush1.msra.mxu0 0.0
        %902 = vmatprep.subr.mxu0 0.0
        %903 = vmatpush1.msra.mxu0 0.0
        %904 = vmatprep.subr.mxu0 0.0
        %905 = vmatpush1.msra.mxu0 0.0
        %906 = vmatprep.subr.mxu0 0.0
        %907 = vmatpush1.msra.mxu0 0.0
        %908 = vmatprep.subr.mxu0 0.0
        %909 = vmatpush1.msra.mxu0 0.0
        %910 = vmatprep.subr.mxu0 0.0
        %911 = vmatpush1.msra.mxu0 0.0
        %912 = vmatprep.subr.mxu0 0.0
        %913 = vmatpush1.msra.mxu0 0.0
        %914 = vmatprep.subr.mxu0 0.0
        %915 = vmatpush1.msra.mxu0 0.0
        %916 = vmatprep.mubr.f32.mxu0 0.0
        %917 = vmatmul.mubr.f32.gmra.mrb[0].mxu0 %v850
        %v918 = vpop.f32.mrb[0].mxu0
        %v919 = vadd.f32 %v847, %v918
        %v920 = vpop.f32.mrb[0].mxu0
        %921 = vdwg.mxu0
        %v922 = vld [vmem:[%s5] sm:$0xff]
        %v923 = vld [vmem:[%s5 + $0x8] sm:$0xff]
        %v924 = vld [vmem:[%s5 + $0x10] sm:$0xff]
        %v925 = vld [vmem:[%s5 + $0x18] sm:$0xff]
        %v926 = vld [vmem:[%s6] sm:$0x1]
        %vm927 = vcmask 261120
        %v929 = vsel %vm927, %v919, 0
        %931 = vmatprep.subr.mxu0 0.0
        %932 = vmatpush1.msra.mxu0 %v922
        %933 = vmatprep.subr.mxu0 0.0
        %934 = vmatpush1.msra.mxu0 %v923
        %935 = vmatprep.subr.mxu0 0.0
        %936 = vmatpush1.msra.mxu0 %v924
        %937 = vmatprep.subr.mxu0 0.0
        %938 = vmatpush1.msra.mxu0 %v925
        %939 = vmatprep.subr.mxu0 0.0
        %940 = vmatpush1.msra.mxu0 0.0
        %941 = vmatprep.subr.mxu0 0.0
        %942 = vmatpush1.msra.mxu0 0.0
        %943 = vmatprep.subr.mxu0 0.0
        %944 = vmatpush1.msra.mxu0 0.0
        %945 = vmatprep.subr.mxu0 0.0
        %946 = vmatpush1.msra.mxu0 0.0
        %947 = vmatprep.subr.mxu0 0.0
        %948 = vmatpush1.msra.mxu0 0.0
        %949 = vmatprep.subr.mxu0 0.0
        %950 = vmatpush1.msra.mxu0 0.0
        %951 = vmatprep.subr.mxu0 0.0
        %952 = vmatpush1.msra.mxu0 0.0
        %953 = vmatprep.subr.mxu0 0.0
        %954 = vmatpush1.msra.mxu0 0.0
        %955 = vmatprep.subr.mxu0 0.0
        %956 = vmatpush1.msra.mxu0 0.0
        %957 = vmatprep.subr.mxu0 0.0
        %958 = vmatpush1.msra.mxu0 0.0
        %959 = vmatprep.subr.mxu0 0.0
        %960 = vmatpush1.msra.mxu0 0.0
        %961 = vmatprep.subr.mxu0 0.0
        %962 = vmatpush1.msra.mxu0 0.0
        %963 = vmatprep.subr.mxu0 0.0
        %964 = vmatpush1.msra.mxu0 0.0
        %965 = vmatprep.subr.mxu0 0.0
        %966 = vmatpush1.msra.mxu0 0.0
        %967 = vmatprep.subr.mxu0 0.0
        %968 = vmatpush1.msra.mxu0 0.0
        %969 = vmatprep.subr.mxu0 0.0
        %970 = vmatpush1.msra.mxu0 0.0
        %971 = vmatprep.subr.mxu0 0.0
        %972 = vmatpush1.msra.mxu0 0.0
        %973 = vmatprep.subr.mxu0 0.0
        %974 = vmatpush1.msra.mxu0 0.0
        %975 = vmatprep.subr.mxu0 0.0
        %976 = vmatpush1.msra.mxu0 0.0
        %977 = vmatprep.subr.mxu0 0.0
        %978 = vmatpush1.msra.mxu0 0.0
        %979 = vmatprep.subr.mxu0 0.0
        %980 = vmatpush1.msra.mxu0 0.0
        %981 = vmatprep.subr.mxu0 0.0
        %982 = vmatpush1.msra.mxu0 0.0
        %983 = vmatprep.subr.mxu0 0.0
        %984 = vmatpush1.msra.mxu0 0.0
        %985 = vmatprep.subr.mxu0 0.0
        %986 = vmatpush1.msra.mxu0 0.0
        %987 = vmatprep.subr.mxu0 0.0
        %988 = vmatpush1.msra.mxu0 0.0
        %989 = vmatprep.subr.mxu0 0.0
        %990 = vmatpush1.msra.mxu0 0.0
        %991 = vmatprep.subr.mxu0 0.0
        %992 = vmatpush1.msra.mxu0 0.0
        %993 = vmatprep.subr.mxu0 0.0
        %994 = vmatpush1.msra.mxu0 0.0
        %995 = vmatprep.mubr.f32.mxu0 0.0
        %996 = vmatmul.mubr.f32.gmra.mrb[0].mxu0 %v929
        %v997 = vpop.f32.mrb[0].mxu0
        %v998 = vadd.f32 %v926, %v997
        %v999 = vpop.f32.mrb[0].mxu0
        %1000 = vdwg.mxu0
        %v1001 = vmax.f32 %v998, 0.0
        %v1002 = vld [vmem:[%s7] sm:$0xff]
        %v1003 = vld [vmem:[%s7 + $0x8] sm:$0xff]
        %v1004 = vld [vmem:[%s7 + $0x10] sm:$0xff]
        %v1005 = vld [vmem:[%s7 + $0x18] sm:$0xff]
        %v1006 = vld [vmem:[%s7 + $0x20] sm:$0xff]
        %v1007 = vld [vmem:[%s7 + $0x28] sm:$0xff]
        %v1008 = vld [vmem:[%s7 + $0x30] sm:$0xff]
        %v1009 = vld [vmem:[%s7 + $0x38] sm:$0xff]
        %v1010 = vld [vmem:[%s8] sm:$0x1]
        %vm1011 = vcmask 523264
        %v1013 = vsel %vm1011, %v1001, 0
        %1015 = vmatprep.subr.mxu0 0.0
        %1016 = vmatpush1.msra.mxu0 %v1002
        %1017 = vmatprep.subr.mxu0 0.0
        %1018 = vmatpush1.msra.mxu0 %v1003
        %1019 = vmatprep.subr.mxu0 0.0
        %1020 = vmatpush1.msra.mxu0 %v1004
        %1021 = vmatprep.subr.mxu0 0.0
        %1022 = vmatpush1.msra.mxu0 %v1005
        %1023 = vmatprep.subr.mxu0 0.0
        %1024 = vmatpush1.msra.mxu0 %v1006
        %1025 = vmatprep.subr.mxu0 0.0
        %1026 = vmatpush1.msra.mxu0 %v1007
        %1027 = vmatprep.subr.mxu0 0.0
        %1028 = vmatpush1.msra.mxu0 %v1008
        %1029 = vmatprep.subr.mxu0 0.0
        %1030 = vmatpush1.msra.mxu0 %v1009
        %1031 = vmatprep.subr.mxu0 0.0
        %1032 = vmatpush1.msra.mxu0 0.0
        %1033 = vmatprep.subr.mxu0 0.0
        %1034 = vmatpush1.msra.mxu0 0.0
        %1035 = vmatprep.subr.mxu0 0.0
        %1036 = vmatpush1.msra.mxu0 0.0
        %1037 = vmatprep.subr.mxu0 0.0
        %1038 = vmatpush1.msra.mxu0 0.0
        %1039 = vmatprep.subr.mxu0 0.0
        %1040 = vmatpush1.msra.mxu0 0.0
        %1041 = vmatprep.subr.mxu0 0.0
        %1042 = vmatpush1.msra.mxu0 0.0
        %1043 = vmatprep.subr.mxu0 0.0
        %1044 = vmatpush1.msra.mxu0 0.0
        %1045 = vmatprep.subr.mxu0 0.0
        %1046 = vmatpush1.msra.mxu0 0.0
        %1047 = vmatprep.subr.mxu0 0.0
        %1048 = vmatpush1.msra.mxu0 0.0
        %1049 = vmatprep.subr.mxu0 0.0
        %1050 = vmatpush1.msra.mxu0 0.0
        %1051 = vmatprep.subr.mxu0 0.0
        %1052 = vmatpush1.msra.mxu0 0.0
        %1053 = vmatprep.subr.mxu0 0.0
        %1054 = vmatpush1.msra.mxu0 0.0
        %1055 = vmatprep.subr.mxu0 0.0
        %1056 = vmatpush1.msra.mxu0 0.0
        %1057 = vmatprep.subr.mxu0 0.0
        %1058 = vmatpush1.msra.mxu0 0.0
        %1059 = vmatprep.subr.mxu0 0.0
        %1060 = vmatpush1.msra.mxu0 0.0
        %1061 = vmatprep.subr.mxu0 0.0
        %1062 = vmatpush1.msra.mxu0 0.0
        %1063 = vmatprep.subr.mxu0 0.0
        %1064 = vmatpush1.msra.mxu0 0.0
        %1065 = vmatprep.subr.mxu0 0.0
        %1066 = vmatpush1.msra.mxu0 0.0
        %1067 = vmatprep.subr.mxu0 0.0
        %1068 = vmatpush1.msra.mxu0 0.0
        %1069 = vmatprep.subr.mxu0 0.0
        %1070 = vmatpush1.msra.mxu0 0.0
        %1071 = vmatprep.subr.mxu0 0.0
        %1072 = vmatpush1.msra.mxu0 0.0
        %1073 = vmatprep.subr.mxu0 0.0
        %1074 = vmatpush1.msra.mxu0 0.0
        %1075 = vmatprep.subr.mxu0 0.0
        %1076 = vmatpush1.msra.mxu0 0.0
        %1077 = vmatprep.subr.mxu0 0.0
        %1078 = vmatpush1.msra.mxu0 0.0
        %1079 = vmatprep.mubr.f32.mxu0 0.0
        %1080 = vmatmul.mubr.f32.gmra.mrb[0].mxu0 %v1013
        %v1081 = vpop.f32.mrb[0].mxu0
        %v1082 = vadd.f32 %v1010, %v1081
        %v1083 = vpop.f32.mrb[0].mxu0
        %1084 = vdwg.mxu0
        %vm1085 = vcmask 253952
        %1086 = vst.msk [vmem:[%s356] sm:$0x1] %vm1085, %v919
        %vm1087 = vcmask 122880
        %1088 = vst.msk [vmem:[%s362] sm:$0x1] %vm1087, %v1082
        %s1089 = sand.u32 %s230, 1
        %s1090 = scalar_lea.sflag [#allocation3], %s1089
        %s1091 = sand.u32 %s230, 1
        %s1092 = scalar_lea.vmem [#allocation2], %s1091
        %s1093 = sand.u32 %s256, 1
        %s1094 = scalar_lea.sflag [#allocation5], %s1093
        %s1095 = sand.u32 %s256, 1
        %s1096 = scalar_lea.vmem [#allocation4], %s1095
        // Predicated region
        $region57: #{contrastive_forward.1} parent=55 // pred_check
          %p1097 = pneg %p240
        $region58: #{contrastive_forward.1} parent=55 // pred_check_branch
          %1099 = sbr.rel (%p1097) target = $region60
        $region59: #{contrastive_forward.1} parent=55 // pred_region
          %s1101 = ssub.s32 16, 16
          %1102 = vsyncadd %s1090, %s1101
          %s1103 = smul.addr %s28, 16
          %s1104 = scalar_lea.hbm %s9, %s1103
          %s1106 = sshll.u32 %s1092, 4
          %s1107 = int_to_ptr.vmem [resolvable:$true] %s1106
          %1109 = dma.vmem_to_hbm [thread:$0]  %s1107, 16, %s1104, %s1090
        $region60: #{contrastive_forward.1} parent=55 // pred_fallthru
          _
        // Predicated region
        $region61: #{contrastive_forward.1} parent=55 // pred_check
          %p1110 = pneg %p266
        $region62: #{contrastive_forward.1} parent=55 // pred_check_branch
          %1112 = sbr.rel (%p1110) target = $region64
        $region63: #{contrastive_forward.1} parent=55 // pred_region
          %s1114 = ssub.s32 16, 16
          %1115 = vsyncadd %s1094, %s1114
          %s1116 = smul.addr %s28, 16
          %s1117 = scalar_lea.hbm %s10, %s1116
          %s1119 = sshll.u32 %s1096, 4
          %s1120 = int_to_ptr.vmem [resolvable:$true] %s1119
          %1122 = dma.vmem_to_hbm [thread:$0]  %s1120, 16, %s1117, %s1094
        $region64: #{contrastive_forward.1} parent=55 // pred_fallthru
          _
      $region56: #{contrastive_forward.1} parent=5 // pred_fallthru
        _
      %p1123 = scmp.le.s32.totalorder 2, %s23
      // Predicated region
      $region65: #{contrastive_forward.1} parent=5 // pred_check
        %p1124 = pneg %p1123
      $region66: #{contrastive_forward.1} parent=5 // pred_check_branch
        %1126 = sbr.rel (%p1124) target = $region68
      $region67: #{contrastive_forward.1} parent=5 // pred_region
        %s1127 = ssub.s32 %s23, 2
        // Predicated region
        $region69: #{contrastive_forward.1} parent=67 // pred_check
          %p1128 = pneg %p246
        $region70: #{contrastive_forward.1} parent=67 // pred_check_branch
          %1130 = sbr.rel (%p1128) target = $region72
        $region71: #{contrastive_forward.1} parent=67 // pred_region
          %s1131 = sand.u32 %s231, 1
          %s1132 = scalar_lea.sflag [#allocation3], %s1131
          %s1133 = sand.u32 %s231, 1
          %s1134 = scalar_lea.vmem [#allocation2], %s1133
          %1135 = dma.done %s1132, 16
        $region72: #{contrastive_forward.1} parent=67 // pred_fallthru
          _
        // Predicated region
        $region73: #{contrastive_forward.1} parent=67 // pred_check
          %p1136 = pneg %p272
        $region74: #{contrastive_forward.1} parent=67 // pred_check_branch
          %1138 = sbr.rel (%p1136) target = $region76
        $region75: #{contrastive_forward.1} parent=67 // pred_region
          %s1139 = sand.u32 %s257, 1
          %s1140 = scalar_lea.sflag [#allocation5], %s1139
          %s1141 = sand.u32 %s257, 1
          %s1142 = scalar_lea.vmem [#allocation4], %s1141
          %1143 = dma.done %s1140, 16
        $region76: #{contrastive_forward.1} parent=67 // pred_fallthru
          _
      $region68: #{contrastive_forward.1} parent=5 // pred_fallthru
        _
    $region6: #{contrastive_forward.1} parent=1 // loop_footer
      %s27 = sadd.s32 1, %s23
    $region7: #{contrastive_forward.1} parent=1 // loop_footer_branch
      %22 = sbr.rel target = $region3
    $region8: #{contrastive_forward.1} parent=1 // loop_exit
      _
    %1144 = vsyncpa [#allocation3], 1
    %s1145 = scalar_lea.sflag [#allocation3], 1
    %1146 = vsyncpa %s1145, 1
    %1147 = vsyncpa [#allocation5], 1
    %s1148 = scalar_lea.sflag [#allocation5], 1
    %1149 = vsyncpa %s1148, 1

</llo_original>
